<compile_context>
chip_gen: v5e
topology: v5e:2x2
jax: 0.10.0
libtpu: 0.0.40
codegen_flags: <defaults>
</compile_context>

<pallas_src>
import math
import functools

import jax
import jax.numpy as jnp
from jax import lax
from jax.experimental import pallas as pl
from jax.experimental.pallas import tpu as pltpu


def _transformer_kernel(x_ref, w_ref, gamma_ref, o_ref, *,
                        num_heads, hidden_dim, seq_len, batch_tile, act):
    S, H = seq_len, num_heads
    C = x_ref.shape[-1]
    dh = hidden_dim // H          # per-head q/k dim
    dv = C // H                   # per-head v dim

    x = x_ref[...]                # (batch_tile*S, C) f32 — kept f32 for the exact residual
    xb = x.astype(jnp.bfloat16)

    # Fused q/k/v projection: one bf16 MXU pass over the (C, 2*hidden + C) weight.
    # Wq columns were pre-scaled by 1/sqrt(dh) in the wrapper, so q is already scaled.
    qkv = jnp.dot(xb, w_ref[...], preferred_element_type=jnp.float32)
    q = qkv[:, :hidden_dim].astype(jnp.bfloat16)                 # (rows, hidden), pre-scaled
    k = qkv[:, hidden_dim:2 * hidden_dim].astype(jnp.bfloat16)   # (rows, hidden)
    v = qkv[:, 2 * hidden_dim:].astype(jnp.bfloat16)             # (rows, C)

    gamma = gamma_ref[0]          # scalar from SMEM

    # Static loops (batch_tile and num_heads are small Python ints): attention never
    # mixes batches, and each head's result is stored directly at its lane offset.
    for b in range(batch_tile):
        r0 = b * S
        for h in range(H):
            qh = q[r0:r0 + S, h * dh:(h + 1) * dh]   # (S, dh) bf16, already / sqrt(dh)
            kh = k[r0:r0 + S, h * dh:(h + 1) * dh]   # (S, dh) bf16
            vh = v[r0:r0 + S, h * dv:(h + 1) * dv]   # (S, dv) bf16

            # scores = q @ k^T (contract last dims; no explicit transpose needed)
            s = lax.dot_general(qh, kh, (((1,), (1,)), ((), ())),
                                preferred_element_type=jnp.float32)      # (S, S) f32

            if act == 'sigmoid':
                s = jax.nn.sigmoid(s)
            elif act == 'relu':
                s = jnp.maximum(s, 0.0)
            elif act == 'leaky_relu':
                s = jnp.where(s > 0, s, 0.2 * s)
            # act == 'none' -> identity

            # softmax over keys (f32 elementwise math; EUP reciprocal)
            s = s - jnp.max(s, axis=-1, keepdims=True)
            p = jnp.exp(s)
            p = p * pl.reciprocal(jnp.sum(p, axis=-1, keepdims=True), approx=True)
            # TODO(synk): att_drop (dropout) not applied; p=0 in this config.

            ob = jnp.dot(p.astype(jnp.bfloat16), vh,
                         preferred_element_type=jnp.float32)             # (S, dv) f32

            o_ref[r0:r0 + S, h * dv:(h + 1) * dv] = (
                gamma * ob + x[r0:r0 + S, h * dv:(h + 1) * dv]).astype(o_ref.dtype)


def transformer_forward(x, params, *, num_heads=1, act='none', batch_tile=1):
    """x: (B, M, C) float32. params: PyTorch-convention weights (out, in), no biases."""
    if act not in ('none', 'sigmoid', 'relu', 'leaky_relu'):
        raise NotImplementedError(act)

    B, M, C = x.shape
    assert C % (num_heads * 4) == 0            # mirrors the module's assert
    hidden = C // 4
    dh = hidden // num_heads
    scale = 1.0 / math.sqrt(dh)                # 1/sqrt(query.size(-1)) == 1/sqrt(head_dim)

    assert B % batch_tile == 0
    rows = batch_tile * M
    assert rows % 8 == 0 or batch_tile == B    # sublane constraint on the row-tile block

    # Fold the attention scale into Wq, transpose (out,in)->(in,out), fuse q|k|v, cast bf16.
    w_qkv = jnp.concatenate(
        [params["wq"].T * scale, params["wk"].T, params["wv"].T],
        axis=1).astype(jnp.bfloat16)           # (C, 2*hidden + C)
    gamma = params["gamma"].reshape(1).astype(jnp.float32)

    x2d = x.reshape(B * M, C)                  # flatten rows for lane-dense row tiles

    kernel = functools.partial(_transformer_kernel,
                               num_heads=num_heads, hidden_dim=hidden,
                               seq_len=M, batch_tile=batch_tile, act=act)

    flops = 2 * B * M * C * (2 * hidden + C) + 2 * B * M * M * (hidden + C)
    transcendentals = B * num_heads * M * M
    bytes_accessed = (B * M * C * 4) * 2 + (2 * hidden + C) * C * 2 + 4

    out2d = pl.pallas_call(
        kernel,
        out_shape=jax.ShapeDtypeStruct((B * M, C), x.dtype),
        grid=(B // batch_tile,),
        in_specs=[
            pl.BlockSpec((rows, C), lambda i: (i, 0)),                 # x row tile
            pl.BlockSpec((C, 2 * hidden + C), lambda i: (0, 0)),       # fused QKV weight (resident)
            pl.BlockSpec(memory_space=pltpu.SMEM),                     # gamma scalar
        ],
        out_specs=pl.BlockSpec((rows, C), lambda i: (i, 0)),           # lane-dense (C-wide) output
        compiler_params=pltpu.CompilerParams(
            dimension_semantics=("parallel",),
            vmem_limit_bytes=32 * 1024 * 1024),
        cost_estimate=pl.CostEstimate(flops=flops,
                                      transcendentals=transcendentals,
                                      bytes_accessed=bytes_accessed),
    )(x2d, w_qkv, gamma)

    return out2d.reshape(B, M, C)


def _apply_act(a, act):
    if act == 'sigmoid':
        return jax.nn.sigmoid(a)
    if act == 'relu':
        return jnp.maximum(a, 0.0)
    if act == 'leaky_relu':
        return jnp.where(a > 0, a, 0.2 * a)
    return a


def _reference_forward(x, params, *, num_heads=1, act='none'):
    """Pure-JAX f32 reference mirroring the PyTorch forward exactly."""
    B, M, C = x.shape
    H = num_heads
    q = x @ params["wq"].T                     # (B, M, hidden)
    k = x @ params["wk"].T                     # (B, M, hidden)
    v = x @ params["wv"].T                     # (B, M, C)
    q = q.reshape(B, M, H, -1).transpose(0, 2, 1, 3)     # (B, H, M, dh)
    k = k.reshape(B, M, H, -1).transpose(0, 2, 3, 1)     # (B, H, dh, M)
    v = v.reshape(B, M, H, -1).transpose(0, 2, 1, 3)     # (B, H, M, dv)
    atten = jnp.matmul(q, k) / math.sqrt(q.shape[-1])
    scores = jax.nn.softmax(_apply_act(atten, act), axis=-1)
    o = params["gamma"][0] * jnp.matmul(scores, v).transpose(0, 2, 1, 3)
    return o.reshape(B, M, C) + x


def _init_params(key, n_channels):
    """Deterministic synthetic init (PyTorch Linear convention, bias=False)."""
    hidden = n_channels // 4
    ks = jax.random.split(key, 3)
    bound = 1.0 / math.sqrt(n_channels)
    return {
        "wq": jax.random.uniform(ks[0], (hidden, n_channels), jnp.float32, -bound, bound),
        "wk": jax.random.uniform(ks[1], (hidden, n_channels), jnp.float32, -bound, bound),
        "wv": jax.random.uniform(ks[2], (n_channels, n_channels), jnp.float32, -bound, bound),
        "gamma": jnp.zeros((1,), jnp.float32),   # nn.init.zeros_ in reset_parameters
    }


if __name__ == "__main__":
    B, M, C = 2, 8, 128                        # (batch, seq, n_channels); hidden = 32

    key = jax.random.PRNGKey(0)
    kx, kp = jax.random.split(key)
    x = jax.random.normal(kx, (B, M, C), jnp.float32)
    params = _init_params(kp, C)

    # 1) Module-faithful defaults: num_heads=1, act='none', gamma=0 -> output == x.
    out0 = transformer_forward(x, params, num_heads=1, batch_tile=1)
    jax.block_until_ready(out0)
    ref0 = _reference_forward(x, params, num_heads=1)
    assert jnp.allclose(out0, ref0, atol=1e-5, rtol=1e-5)

    # 2) Nontrivial gamma, single head (exercises the attention path end-to-end).
    p_nz = dict(params, gamma=jnp.array([0.5], jnp.float32))
    out1 = transformer_forward(x, p_nz, num_heads=1, batch_tile=1)
    jax.block_until_ready(out1)
    ref1 = _reference_forward(x, p_nz, num_heads=1)
    assert jnp.allclose(out1, ref1, atol=2e-2, rtol=2e-2)

    # 3) Multi-head + relu activation + whole-batch row tile (head loop, act path, rows=16).
    out4 = transformer_forward(x, p_nz, num_heads=4, act='relu', batch_tile=2)
    jax.block_until_ready(out4)
    ref4 = _reference_forward(x, p_nz, num_heads=4, act='relu')
    assert jnp.allclose(out4, ref4, atol=2e-2, rtol=2e-2)

    print("KERNEL_OK")
</pallas_src>

<mosaic_0001>
module attributes {stable_mosaic.version = 11 : i64} {
  func.func @_transformer_kernel(%arg0: i32, %arg1: memref<8x128xf32, #tpu.memory_space<vmem>>, %arg2: memref<128x192xbf16, #tpu.memory_space<vmem>>, %arg3: memref<1xf32, #tpu.memory_space<smem>>, %arg4: memref<8x128xf32, #tpu.memory_space<vmem>>) attributes {dimension_semantics = [#tpu.dimension_semantics<parallel>], iteration_bounds = array<i64: 2>, scalar_prefetch = 0 : i64, scratch_operands = 0 : i64, tpu.core_type = #tpu.core_type<tc>, window_params = [{transform_indices = @transform_0, window_bounds = array<i64: 8, 128>}, {pipeline_mode = #tpu.pipeline_mode<synchronous>, transform_indices = @transform_1, window_bounds = array<i64: 128, 192>}, {transform_indices = @transform_2, window_bounds = array<i64: 1>}, {transform_indices = @transform_3, window_bounds = array<i64: 8, 128>}]} {
    %c0 = arith.constant 0 : index
    %c0_0 = arith.constant 0 : index
    %0 = vector.load %arg1[%c0, %c0_0] : memref<8x128xf32, #tpu.memory_space<vmem>>, vector<8x128xf32>
    %1 = arith.truncf %0 : vector<8x128xf32> to vector<8x128xbf16>
    %c0_1 = arith.constant 0 : index
    %c0_2 = arith.constant 0 : index
    %2 = vector.load %arg2[%c0_1, %c0_2] : memref<128x192xbf16, #tpu.memory_space<vmem>>, vector<128x192xbf16>
    %cst = arith.constant dense<0.000000e+00> : vector<8x192xf32>
    %3 = tpu.matmul %1, %2, %cst {dimension_numbers = #tpu.dot_dimension_numbers<[1], [0], [0], [1], [0, 0, 1, 1], [], []>} : vector<8x128xbf16>, vector<128x192xbf16>, vector<8x192xf32> -> vector<8x192xf32>
    %4 = vector.extract_strided_slice %3 {offsets = [0, 0], sizes = [8, 32], strides = [1, 1]} : vector<8x192xf32> to vector<8x32xf32>
    %5 = arith.truncf %4 : vector<8x32xf32> to vector<8x32xbf16>
    %6 = vector.extract_strided_slice %3 {offsets = [0, 32], sizes = [8, 32], strides = [1, 1]} : vector<8x192xf32> to vector<8x32xf32>
    %7 = arith.truncf %6 : vector<8x32xf32> to vector<8x32xbf16>
    %8 = vector.extract_strided_slice %3 {offsets = [0, 64], sizes = [8, 128], strides = [1, 1]} : vector<8x192xf32> to vector<8x128xf32>
    %9 = arith.truncf %8 : vector<8x128xf32> to vector<8x128xbf16>
    %c0_3 = arith.constant 0 : index
    %10 = memref.load %arg3[%c0_3] : memref<1xf32, #tpu.memory_space<smem>>
    %cst_4 = arith.constant dense<0.000000e+00> : vector<8x8xf32>
    %11 = tpu.matmul %5, %7, %cst_4 {dimension_numbers = #tpu.dot_dimension_numbers<[1], [1], [0], [0], [0, 0, 1, 0], [], []>} : vector<8x32xbf16>, vector<8x32xbf16>, vector<8x8xf32> -> vector<8x8xf32>
    %cst_5 = arith.constant dense<0xFF800000> : vector<8xf32>
    %12 = vector.multi_reduction <maximumf>, %11, %cst_5 [1] : vector<8x8xf32> to vector<8xf32>
    %13 = vector.shape_cast %12 : vector<8xf32> to vector<8x1xf32>
    %14 = vector.broadcast %13 : vector<8x1xf32> to vector<8x8xf32>
    %15 = arith.subf %11, %14 : vector<8x8xf32>
    %16 = math.exp %15 : vector<8x8xf32>
    %cst_6 = arith.constant dense<0.000000e+00> : vector<8xf32>
    %17 = vector.multi_reduction <add>, %16, %cst_6 [1] : vector<8x8xf32> to vector<8xf32>
    %18 = vector.shape_cast %17 : vector<8xf32> to vector<8x1xf32>
    %19 = tpu.reciprocal %18 {approx = true} : vector<8x1xf32> -> vector<8x1xf32>
    %20 = vector.broadcast %19 : vector<8x1xf32> to vector<8x8xf32>
    %21 = arith.mulf %16, %20 : vector<8x8xf32>
    %22 = arith.truncf %21 : vector<8x8xf32> to vector<8x8xbf16>
    %cst_7 = arith.constant dense<0.000000e+00> : vector<8x128xf32>
    %23 = tpu.matmul %22, %9, %cst_7 {dimension_numbers = #tpu.dot_dimension_numbers<[1], [0], [0], [1], [0, 0, 1, 1], [], []>} : vector<8x8xbf16>, vector<8x128xbf16>, vector<8x128xf32> -> vector<8x128xf32>
    %24 = vector.broadcast %10 : f32 to vector<8x128xf32>
    %25 = arith.mulf %24, %23 : vector<8x128xf32>
    %26 = arith.addf %25, %0 : vector<8x128xf32>
    %c0_8 = arith.constant 0 : index
    %c0_9 = arith.constant 0 : index
    %27 = vector.load %arg4[%c0_8, %c0_9] : memref<8x128xf32, #tpu.memory_space<vmem>>, vector<8x128xf32>
    tpu.vector_store %arg4[%c0_8, %c0_9], %26 {strides = array<i32>} : memref<8x128xf32, #tpu.memory_space<vmem>>, vector<8x128xf32>,
    return
  }
  func.func @transform_0(%arg0: i32) -> (i32, i32) {
    %c0_i32 = arith.constant 0 : i32
    %c0_i32_0 = arith.constant 0 : i32
    return %arg0, %c0_i32 : i32, i32
  }
  func.func @transform_1(%arg0: i32) -> (i32, i32) {
    %c0_i32 = arith.constant 0 : i32
    %c0_i32_0 = arith.constant 0 : i32
    %c0_i32_1 = arith.constant 0 : i32
    return %c0_i32, %c0_i32_0 : i32, i32
  }
  func.func @transform_2(%arg0: i32) -> i32 {
    %c0_i32 = arith.constant 0 : i32
    %c0_i32_0 = arith.constant 0 : i32
    return %c0_i32 : i32
  }
  func.func @transform_3(%arg0: i32) -> (i32, i32) {
    %c0_i32 = arith.constant 0 : i32
    %c0_i32_0 = arith.constant 0 : i32
    return %arg0, %c0_i32 : i32, i32
  }
}

</mosaic_0001>

<llo_original>
// kernel: tpu_custom_call.1
$region0: #{tpu_custom_call.1}
  #allocation0 [shape = 'u32[]', space=smem, size = 0x4, offset = 0x4, fixed_abs, tag = 'smem constant byte address 0x4 - core index']
  #allocation1 [shape = 'u32[72,128]{1,0:T(1,128)}', space=vmem, size = 0x9000, scoped, tag = 'internal scratch']
  #allocation2 [shape = 'f32[1]{0:T(128)S(6)}', space=smem, size = 0x200, scoped, tag = 'scoped memory for tpu_custom_call.1']
  %s0 = inlined_call_operand.vmem [shape: f32[16,128], index: 0, kind: input, shape index: {}]
  %s1 = inlined_call_operand.vmem [shape: bf16[128,192], index: 1, kind: input, shape index: {}]
  %s2 = inlined_call_operand.<no memory space> [shape: f32[1], index: 2, kind: input, shape index: {}]
  %s3 = inlined_call_operand.hbm [shape: f32[16,128], index: 3, kind: output, shape index: {}]
  %s4 = sld [smem:[#allocation0]]
  $region45: #{tpu_custom_call.1} parent=0
    _
  %s6 = ssub.s32 1, %s4
  %s7 = scalar_select 0, %s6, %s4
  %8 = sst [smem:[#allocation2]] %s2
  $region1: #{tpu_custom_call.1} parent=0
    #allocation3 [shape = 'u8[8192]{0}', space=vmem, size = 0x2000, scoped, tag = 'output window, operand 0']
    #allocation4 [shape = 's32[2]{0}', space=sflag, size = 0x8, scoped, tag = 'scoped memory for tpu_custom_call.1']
    %9 = vsyncpa [#allocation4], 0
    %s10 = scalar_lea.sflag [#allocation4], 1
    %11 = vsyncpa %s10, 0
    loop: start=0, step=1, limit=4
    $region2: #{tpu_custom_call.1} parent=1 // loop_pre_header
      _
    $region3: #{tpu_custom_call.1} parent=1 // loop_header
      %s13 = sphi 0, %s17
      %p14 = scmp.ge.s32.totalorder %s13, 4
      %s23 = sphi 0, %s25
      %s26 = sphi 0, %s23
      %s27 = sphi 0, %s26
      %s43 = sphi 0, %s27
      %s47 = sphi 0, %s47
      %s49 = sphi 0, %s47
      %s50 = sphi 0, %s49
      %s64 = sphi 0, %s50
      %s68 = sphi 0, %s68
      %s70 = sphi 0, %s68
      %s71 = sphi 0, %s70
      %s85 = sphi 0, %s71
      %s91 = sphi 0, %s93
      %s94 = sphi 0, %s91
      %s95 = sphi 0, %s94
      %s111 = sphi 0, %s95
    $region4: #{tpu_custom_call.1} parent=1 // loop_header_branch
      %16 = sbr.rel (%p14) target = $region8
    $region5: #{tpu_custom_call.1} parent=1 // loop_body
      %s18 = ssub.s32 %s13, 1
      %s19 = ssub.s32 %s13, 2
      %s20 = sadd.s32 %s13, 1
      %s21 = ssub.s32 %s13, %s20
      %p22 = scmp.eq.s32.totalorder %s21, 0
      %s24 = sadd.s32 %s23, 1
      %s25 = scalar_select %p22, %s23, %s24
      %p28 = pneg %p22
      %p29 = scmp.eq.s32.totalorder %s13, 1
      %p30 = por %p28, %p29
      %p31 = scmp.ne.s32.totalorder %s23, %s26
      %p32 = scmp.eq.s32.totalorder %s13, 0
      %p33 = por %p31, %p32
      %p34 = scmp.ne.s32.totalorder %s23, %s26
      %p35 = scmp.eq.s32.totalorder %s18, 1
      %p36 = por %p34, %p35
      %p37 = scmp.ne.s32.totalorder %s26, %s27
      %p38 = scmp.eq.s32.totalorder %s18, 0
      %p39 = por %p37, %p38
      %p40 = scmp.ne.s32.totalorder %s26, %s27
      %p41 = scmp.eq.s32.totalorder %s19, 1
      %p42 = por %p40, %p41
      %p44 = scmp.ne.s32.totalorder %s27, %s43
      %p45 = scmp.eq.s32.totalorder %s19, 0
      %p46 = por %p44, %p45
      %s48 = sadd.s32 %s47, 1
      %p51 = scmp.eq.s32.totalorder %s13, 1
      %p52 = scmp.ne.s32.totalorder %s47, %s49
      %p53 = scmp.eq.s32.totalorder %s13, 0
      %p54 = por %p52, %p53
      %p55 = scmp.ne.s32.totalorder %s47, %s49
      %p56 = scmp.eq.s32.totalorder %s18, 1
      %p57 = por %p55, %p56
      %p58 = scmp.ne.s32.totalorder %s49, %s50
      %p59 = scmp.eq.s32.totalorder %s18, 0
      %p60 = por %p58, %p59
      %p61 = scmp.ne.s32.totalorder %s49, %s50
      %p62 = scmp.eq.s32.totalorder %s19, 1
      %p63 = por %p61, %p62
      %p65 = scmp.ne.s32.totalorder %s50, %s64
      %p66 = scmp.eq.s32.totalorder %s19, 0
      %p67 = por %p65, %p66
      %s69 = sadd.s32 %s68, 1
      %p72 = scmp.eq.s32.totalorder %s13, 1
      %p73 = scmp.ne.s32.totalorder %s68, %s70
      %p74 = scmp.eq.s32.totalorder %s13, 0
      %p75 = por %p73, %p74
      %p76 = scmp.ne.s32.totalorder %s68, %s70
      %p77 = scmp.eq.s32.totalorder %s18, 1
      %p78 = por %p76, %p77
      %p79 = scmp.ne.s32.totalorder %s70, %s71
      %p80 = scmp.eq.s32.totalorder %s18, 0
      %p81 = por %p79, %p80
      %p82 = scmp.ne.s32.totalorder %s70, %s71
      %p83 = scmp.eq.s32.totalorder %s19, 1
      %p84 = por %p82, %p83
      %p86 = scmp.ne.s32.totalorder %s71, %s85
      %p87 = scmp.eq.s32.totalorder %s19, 0
      %p88 = por %p86, %p87
      %s89 = ssub.s32 %s13, %s20
      %p90 = scmp.eq.s32.totalorder %s89, 0
      %s92 = sadd.s32 %s91, 1
      %s93 = scalar_select %p90, %s91, %s92
      %p96 = pneg %p90
      %p97 = scmp.eq.s32.totalorder %s13, 1
      %p98 = por %p96, %p97
      %p99 = scmp.ne.s32.totalorder %s91, %s94
      %p100 = scmp.eq.s32.totalorder %s13, 0
      %p101 = por %p99, %p100
      %p102 = scmp.ne.s32.totalorder %s91, %s94
      %p103 = scmp.eq.s32.totalorder %s18, 1
      %p104 = por %p102, %p103
      %p105 = scmp.ne.s32.totalorder %s94, %s95
      %p106 = scmp.eq.s32.totalorder %s18, 0
      %p107 = por %p105, %p106
      %p108 = scmp.ne.s32.totalorder %s94, %s95
      %p109 = scmp.eq.s32.totalorder %s19, 1
      %p110 = por %p108, %p109
      %p112 = scmp.ne.s32.totalorder %s95, %s111
      %p113 = scmp.eq.s32.totalorder %s19, 0
      %p114 = por %p112, %p113
      %p115 = scmp.le.s32.totalorder 1, %s13
      %p116 = scmp.lt.s32.totalorder %s13, 3
      %p117 = pnand %p115, %p116
      %p118 = pneg %p117
      // Predicated region
      $region9: #{tpu_custom_call.1} parent=5 // pred_check
        _
      $region10: #{tpu_custom_call.1} parent=5 // pred_check_branch
        %120 = sbr.rel (%p117) target = $region12
      $region11: #{tpu_custom_call.1} parent=5 // pred_region
        %s121 = ssub.s32 %s13, 1
        // Predicated region
        $region13: #{tpu_custom_call.1} parent=11 // pred_check
          %p122 = pneg %p60
        $region14: #{tpu_custom_call.1} parent=11 // pred_check_branch
          %124 = sbr.rel (%p122) target = $region16
        $region15: #{tpu_custom_call.1} parent=11 // pred_region
          _
        $region16: #{tpu_custom_call.1} parent=11 // pred_fallthru
          _
        // Predicated region
        $region17: #{tpu_custom_call.1} parent=11 // pred_check
          %p125 = pneg %p81
        $region18: #{tpu_custom_call.1} parent=11 // pred_check_branch
          %127 = sbr.rel (%p125) target = $region20
        $region19: #{tpu_custom_call.1} parent=11 // pred_region
          _
        $region20: #{tpu_custom_call.1} parent=11 // pred_fallthru
          _
      $region12: #{tpu_custom_call.1} parent=5 // pred_fallthru
        _
      %p128 = scmp.lt.s32.totalorder %s13, 2
      // Predicated region
      $region21: #{tpu_custom_call.1} parent=5 // pred_check
        %p129 = pneg %p128
      $region22: #{tpu_custom_call.1} parent=5 // pred_check_branch
        %131 = sbr.rel (%p129) target = $region24
      $region23: #{tpu_custom_call.1} parent=5 // pred_region
        // Predicated region
        $region25: #{tpu_custom_call.1} parent=23 // pred_check
          %p132 = pneg %p33
        $region26: #{tpu_custom_call.1} parent=23 // pred_check_branch
          %134 = sbr.rel (%p132) target = $region28
        $region27: #{tpu_custom_call.1} parent=23 // pred_region
          %p135 = scmp.lt.s32.totalorder %s13, 1
          %s136 = scalar_select %p135, %s13, 1
          %s137 = smul.addr %s136, 8
          %s138 = scalar_lea.vmem %s0, %s137
        $region28: #{tpu_custom_call.1} parent=23 // pred_fallthru
          _
      $region24: #{tpu_custom_call.1} parent=5 // pred_fallthru
        _
      %p139 = scmp.le.s32.totalorder 1, %s13
      %p140 = scmp.lt.s32.totalorder %s13, 3
      %p141 = pnand %p139, %p140
      %p142 = pneg %p141
      // Predicated region
      $region29: #{tpu_custom_call.1} parent=5 // pred_check
        _
      $region30: #{tpu_custom_call.1} parent=5 // pred_check_branch
        %144 = sbr.rel (%p141) target = $region32
      $region31: #{tpu_custom_call.1} parent=5 // pred_region
        %s145 = ssub.s32 %s13, 1
        %p146 = scmp.lt.s32.totalorder %s18, 1
        %s147 = scalar_select %p146, %s18, 1
        %s148 = smul.addr %s147, 8
        %s149 = scalar_lea.vmem %s0, %s148
        %p150 = pneg %p39
        %p151 = pneg %p36
        %p152 = pneg %p60
        %p153 = pneg %p57
        %p154 = pneg %p81
        %p155 = pneg %p78
        %p156 = pneg %p107
        %p157 = pneg %p104
        %s158 = sand.u32 %s94, 1
        %s159 = scalar_lea.sflag [#allocation4], %s158
        %s160 = sand.u32 %s94, 1
        %s161 = smul.addr %s160, 8
        %s162 = scalar_lea.vmem [#allocation3], %s161
        %p163 = scmp.lt.s32.totalorder %s18, 1
        %s164 = scalar_select %p163, %s18, 1
        %s165 = smul.addr %s164, 8
        %s166 = scalar_lea.vmem %s0, %s165
        %v168 = vld [vmem:[%s166] sm:$0xff]
        %v169 = vpack.c.bf16 %v168, %v168
        %v170 = vld [vmem:[%s1] sm:$0xff]
        %v171 = vld [vmem:[%s1 + $0x8] sm:$0xff]
        %v172 = vld [vmem:[%s1 + $0x10] sm:$0xff]
        %v173 = vld [vmem:[%s1 + $0x18] sm:$0xff]
        %v174 = vld [vmem:[%s1 + $0x20] sm:$0xff]
        %v175 = vld [vmem:[%s1 + $0x28] sm:$0xff]
        %v176 = vld [vmem:[%s1 + $0x30] sm:$0xff]
        %v177 = vld [vmem:[%s1 + $0x38] sm:$0xff]
        %v178 = vld [vmem:[%s1 + $0x40] sm:$0xff]
        %v179 = vld [vmem:[%s1 + $0x48] sm:$0xff]
        %v180 = vld [vmem:[%s1 + $0x50] sm:$0xff]
        %v181 = vld [vmem:[%s1 + $0x58] sm:$0xff]
        %v182 = vld [vmem:[%s1 + $0x60] sm:$0xff]
        %v183 = vld [vmem:[%s1 + $0x68] sm:$0xff]
        %v184 = vld [vmem:[%s1 + $0x70] sm:$0xff]
        %v185 = vld [vmem:[%s1 + $0x78] sm:$0xff]
        %v202 = vunpack.c.l.b16 %v170
        %v203 = vunpack.c.h.b16 %v170
        %v204 = vunpack.c.l.b16 %v171
        %v205 = vunpack.c.h.b16 %v171
        %v206 = vunpack.c.l.b16 %v172
        %v207 = vunpack.c.h.b16 %v172
        %v208 = vunpack.c.l.b16 %v173
        %v209 = vunpack.c.h.b16 %v173
        %v210 = vunpack.c.l.b16 %v174
        %v211 = vunpack.c.h.b16 %v174
        %v212 = vunpack.c.l.b16 %v175
        %v213 = vunpack.c.h.b16 %v175
        %v214 = vunpack.c.l.b16 %v176
        %v215 = vunpack.c.h.b16 %v176
        %v216 = vunpack.c.l.b16 %v177
        %v217 = vunpack.c.h.b16 %v177
        %v218 = vunpack.c.l.b16 %v178
        %v219 = vunpack.c.h.b16 %v178
        %v220 = vunpack.c.l.b16 %v179
        %v221 = vunpack.c.h.b16 %v179
        %v222 = vunpack.c.l.b16 %v180
        %v223 = vunpack.c.h.b16 %v180
        %v224 = vunpack.c.l.b16 %v181
        %v225 = vunpack.c.h.b16 %v181
        %v226 = vunpack.c.l.b16 %v182
        %v227 = vunpack.c.h.b16 %v182
        %v228 = vunpack.c.l.b16 %v183
        %v229 = vunpack.c.h.b16 %v183
        %v230 = vunpack.c.l.b16 %v184
        %v231 = vunpack.c.h.b16 %v184
        %v232 = vunpack.c.l.b16 %v185
        %v233 = vunpack.c.h.b16 %v185
        %v234 = vpack.c.b16 %v204, %v202
        %v235 = vpack.c.b16 %v205, %v203
        %v236 = vpack.c.b16 %v208, %v206
        %v237 = vpack.c.b16 %v209, %v207
        %v238 = vpack.c.b16 %v212, %v210
        %v239 = vpack.c.b16 %v213, %v211
        %v240 = vpack.c.b16 %v216, %v214
        %v241 = vpack.c.b16 %v217, %v215
        %v242 = vpack.c.b16 %v220, %v218
        %v243 = vpack.c.b16 %v221, %v219
        %v244 = vpack.c.b16 %v224, %v222
        %v245 = vpack.c.b16 %v225, %v223
        %v246 = vpack.c.b16 %v228, %v226
        %v247 = vpack.c.b16 %v229, %v227
        %v248 = vpack.c.b16 %v232, %v230
        %v249 = vpack.c.b16 %v233, %v231
        %266 = vmatpush.bf16.msra.mxu0 %v248
        %267 = vmatpush.bf16.msra.mxu0 %v246
        %268 = vmatpush.bf16.msra.mxu0 %v244
        %269 = vmatpush.bf16.msra.mxu0 %v242
        %270 = vmatpush.bf16.msra.mxu0 %v240
        %271 = vmatpush.bf16.msra.mxu0 %v238
        %272 = vmatpush.bf16.msra.mxu0 %v236
        %273 = vmatpush.bf16.msra.mxu0 %v234
        %274 = vmatmul.bf16.gmra.mxu0 %v169
        %v275 = vpop.f32.mrf.mxu0
        %v276 = vadd.f32 0.0, %v275
        %v277 = vpop.f32.mrf.mxu0
        %278 = vdwg.mxu0
        %279 = vmatpush.bf16.msra.mxu0 %v249
        %280 = vmatpush.bf16.msra.mxu0 %v247
        %281 = vmatpush.bf16.msra.mxu0 %v245
        %282 = vmatpush.bf16.msra.mxu0 %v243
        %283 = vmatpush.bf16.msra.mxu0 %v241
        %284 = vmatpush.bf16.msra.mxu0 %v239
        %285 = vmatpush.bf16.msra.mxu0 %v237
        %286 = vmatpush.bf16.msra.mxu0 %v235
        %287 = vmatmul.bf16.gmra.mxu0 %v169
        %v288 = vpop.f32.mrf.mxu0
        %v289 = vadd.f32 0.0, %v288
        %v290 = vpop.f32.mrf.mxu0
        %291 = vdwg.mxu0
        %v292 = vpack.c.bf16 %v276, %v276
        %v293 = vpack.c.bf16 %v289, %v289
        %s294 = sld [smem:[#allocation2]]
        %296 = vrot.lane.b32.xlu0 %v292, 96
        %v297 = vpop.permute.xlu0 %296
        %vm298 = vcmask 261120
        %v300 = vsel %vm298, %v292, 0
        %v303 = vsel %vm298, %v297, 0
        %305 = vmatpush.bf16.xpose.msra.mxu0 0
        %306 = vmatpush.bf16.xpose.msra.mxu0 0
        %307 = vmatpush.bf16.xpose.msra.mxu0 0
        %308 = vmatpush.bf16.xpose.msra.mxu0 0
        %309 = vmatpush.bf16.xpose.msra.mxu0 0
        %310 = vmatpush.bf16.xpose.msra.mxu0 0
        %311 = vmatpush.bf16.xpose.msra.mxu0 0
        %312 = vmatpush.bf16.xpose.msra.mxu0 %v303
        %313 = vmatmul.bf16.gmra.mxu0 %v300
        %v314 = vpop.f32.mrf.mxu0
        %v315 = vadd.f32 0.0, %v314
        %v316 = vpop.f32.mrf.mxu0
        %317 = vdwg.mxu0
        %vm318 = vcmask 64512
        %v319 = vsel %vm318, %v315, -inf
        %320 = vmax.xlane.f32.xlu0 %v319
        %v321 = vpop.xlane.xlu0 %320
        %v322 = vsub.f32 %v315, %v321
        %v323 = vmul.f32 %v322, 1.442695
        %v324 = vpow.pop %v323
        %v325 = vsel %vm318, %v324, 0.0
        %326 = vadd.xlane.f32.xlu0 %v325
        %v327 = vpop.xlane.xlu0 %326
        %v328 = vrcp.pop %v327
        %v329 = vmul.f32 %v324, %v328
        %v330 = vpack.c.bf16 %v329, %v329
        %332 = vrot.lane.b32.xlu0 %v292, 64
        %v333 = vpop.permute.xlu0 %332
        %334 = vrot.lane.b32.xlu0 %v293, 64
        %v335 = vpop.permute.xlu0 %334
        %vm336 = vcmask 523264
        %v337 = vsel %vm336, %v333, %v335
        %v339 = vsel %vm318, %v330, 0
        %vm341 = vcmask 1043456
        %v343 = vsel %vm341, %v337, 0
        %345 = vmatpush.bf16.msra.mxu0 0
        %346 = vmatpush.bf16.msra.mxu0 0
        %347 = vmatpush.bf16.msra.mxu0 0
        %348 = vmatpush.bf16.msra.mxu0 0
        %349 = vmatpush.bf16.msra.mxu0 0
        %350 = vmatpush.bf16.msra.mxu0 0
        %351 = vmatpush.bf16.msra.mxu0 0
        %352 = vmatpush.bf16.msra.mxu0 %v343
        %353 = vmatmul.bf16.gmra.mxu0 %v339
        %v354 = vpop.f32.mrf.mxu0
        %v355 = vadd.f32 0.0, %v354
        %v356 = vpop.f32.mrf.mxu0
        %357 = vdwg.mxu0
        %v358 = vstv %s294
        %v359 = vmul.f32 %v358, %v355
        %v360 = vadd.f32 %v359, %v168
        %361 = vst [vmem:[%s162] sm:$0xff] %v360
        %s362 = sand.u32 %s94, 1
        %s363 = scalar_lea.sflag [#allocation4], %s362
        %s364 = sand.u32 %s94, 1
        %s365 = smul.addr %s364, 8
        %s366 = scalar_lea.vmem [#allocation3], %s365
        // Predicated region
        $region33: #{tpu_custom_call.1} parent=31 // pred_check
          %p367 = pneg %p104
        $region34: #{tpu_custom_call.1} parent=31 // pred_check_branch
          %369 = sbr.rel (%p367) target = $region36
        $region35: #{tpu_custom_call.1} parent=31 // pred_region
          %371 = vsyncadd %s363, 0
          %s372 = smul.addr %s18, 8
          %s373 = scalar_lea.hbm %s3, %s372
          %s375 = sshll.u32 %s366, 4
          %s376 = int_to_ptr.vmem [resolvable:$true] %s375
          %s377 = sshll.u32 %s373, 4
          %s378 = int_to_ptr.hbm [resolvable:$true] %s377
          %380 = dma.vmem_to_hbm [thread:$0]  %s376, 128, %s378, %s363
        $region36: #{tpu_custom_call.1} parent=31 // pred_fallthru
          _
      $region32: #{tpu_custom_call.1} parent=5 // pred_fallthru
        _
      %p381 = scmp.le.s32.totalorder 2, %s13
      // Predicated region
      $region37: #{tpu_custom_call.1} parent=5 // pred_check
        %p382 = pneg %p381
      $region38: #{tpu_custom_call.1} parent=5 // pred_check_branch
        %384 = sbr.rel (%p382) target = $region40
      $region39: #{tpu_custom_call.1} parent=5 // pred_region
        %s385 = ssub.s32 %s13, 2
        // Predicated region
        $region41: #{tpu_custom_call.1} parent=39 // pred_check
          %p386 = pneg %p110
        $region42: #{tpu_custom_call.1} parent=39 // pred_check_branch
          %388 = sbr.rel (%p386) target = $region44
        $region43: #{tpu_custom_call.1} parent=39 // pred_region
          %s389 = sand.u32 %s95, 1
          %s390 = scalar_lea.sflag [#allocation4], %s389
          %s391 = sand.u32 %s95, 1
          %s392 = smul.addr %s391, 8
          %s393 = scalar_lea.vmem [#allocation3], %s392
          %395 = dma.done %s390, 128
        $region44: #{tpu_custom_call.1} parent=39 // pred_fallthru
          _
      $region40: #{tpu_custom_call.1} parent=5 // pred_fallthru
        _
    $region6: #{tpu_custom_call.1} parent=1 // loop_footer
      %s17 = sadd.s32 1, %s13
    $region7: #{tpu_custom_call.1} parent=1 // loop_footer_branch
      %12 = sbr.rel target = $region3
    $region8: #{tpu_custom_call.1} parent=1 // loop_exit
      _
    %396 = vsyncpa [#allocation4], 1
    %s397 = scalar_lea.sflag [#allocation4], 1
    %398 = vsyncpa %s397, 1

</llo_original>
